<compile_context>
chip_gen: v6e
topology: v6e:2x2x1
jax: 0.10.0
libtpu: 0.0.40
codegen_flags: <defaults>
</compile_context>

<pallas_src>
import jax
import jax.numpy as jnp
from jax import lax
from jax.experimental import pallas as pl
from jax.experimental.pallas import tpu as pltpu


def _round_up(x, m):
    return (x + m - 1) // m * m


def _cdiv(a, b):
    return (a + b - 1) // b


def _vmem_capacity_bytes():
    """Physical per-core VMEM (v5e/v6e: 128 MiB, v7x: 64 MiB). Safe fallback."""
    try:
        return int(pltpu.get_tpu_info().vmem_capacity_bytes)
    except Exception:
        return 64 * 1024 * 1024


def _down_kernel(p_ref, w_ref, b_ref, o_ref, acc_ref):
    """One (m-tile, k-tile) grid step.

    p_ref:   (TK, TM)   im2col patches tile (K on sublanes, lane-dense spatial)
    w_ref:   (Cout, TK) conv weights flattened as (dy, dx, cin) -> K
    b_ref:   (Cout, 1)  bias
    o_ref:   (Cout, TM) output tile
    acc_ref: (Cout, TM) f32 accumulator scratch (carried across the k axis)
    """
    k = pl.program_id(1)

    @pl.when(k == 0)
    def _():
        acc_ref[...] = jnp.zeros_like(acc_ref)

    acc_ref[...] += jnp.dot(w_ref[...], p_ref[...],
                            preferred_element_type=jnp.float32)

    @pl.when(k == pl.num_programs(1) - 1)
    def _():
        o_ref[...] = (acc_ref[...] + b_ref[...]).astype(o_ref.dtype)


def down_forward(x_nchw, w_oihw, bias, *, use_bf16=True, out_dtype=None,
                 tk_cap=2048, tm_cap=8192):
    """Conv2d(dim, dim, kernel_size=4, stride=2, padding=1). NCHW in/out."""
    N, Cin, H, W = x_nchw.shape
    Cout, Cin2, KH, KW = w_oihw.shape
    assert (Cin2, KH, KW) == (Cin, 4, 4)
    stride, pad = 2, 1
    H_out = (H + 2 * pad - KH) // stride + 1
    W_out = (W + 2 * pad - KW) // stride + 1
    M = H_out * W_out
    Mtot = N * M                       # batch folded into the lane axis
    K = KH * KW * Cin

    if out_dtype is None:
        out_dtype = x_nchw.dtype
    compute_dtype = jnp.bfloat16 if use_bf16 else x_nchw.dtype
    in_bytes = jnp.dtype(compute_dtype).itemsize
    out_bytes = jnp.dtype(out_dtype).itemsize

    # ---- tile sizes from a per-generation VMEM budget -----------------------
    cap = _vmem_capacity_bytes()
    vmem_limit = max(32 << 20, min(int(cap * 0.75), 96 << 20))
    budget = int(vmem_limit * 0.85)    # headroom for sems / compiler scratch

    if K <= tk_cap:
        TK, K_pad = K, K               # full contraction dim (no lane tiling)
    else:
        TK = tk_cap                    # multiple of 128 -> legal weight lane tile
        K_pad = _round_up(K, TK)

    # per-step VMEM: 2x patches buf + 2x weight buf + 2x out buf + f32 acc
    denom = 2 * TK * in_bytes + 2 * Cout * out_bytes + 4 * Cout
    tm_budget = (budget - 2 * Cout * TK * in_bytes) // max(denom, 1)
    tm_budget = max(128, (tm_budget // 128) * 128)
    TM = min(tm_budget, tm_cap, _round_up(Mtot, 128))
    if Mtot >= 256:                    # keep >=2 parallel m-tiles (v7x: 2 TCs)
        TM = min(TM, _round_up(_cdiv(Mtot, 2), 128))
    TM = max(TM, 128)
    M_pad = _round_up(Mtot, TM)

    # ---- im2col slab in the wrapper, materialised in bf16 by default --------
    # NOTE: remaining headroom is building the patches inside the kernel from a
    # halo'd input row band (memory_space=pl.ANY + manual DMA) to drop the slab.
    xp = jnp.pad(x_nchw, ((0, 0), (0, 0), (pad, pad), (pad, pad)))
    xp = xp.astype(compute_dtype)
    cols = []
    for dy in range(KH):
        for dx in range(KW):
            sl = lax.slice(
                xp,
                (0, 0, dy, dx),
                (N, Cin, dy + stride * (H_out - 1) + 1,
                 dx + stride * (W_out - 1) + 1),
                (1, 1, stride, stride))                  # (N, Cin, Ho, Wo)
            cols.append(sl)
    patches = jnp.stack(cols, axis=0)                    # (16, N, Cin, Ho, Wo)
    patches = jnp.transpose(patches, (0, 2, 1, 3, 4))    # (16, Cin, N, Ho, Wo)
    patches = patches.reshape(K, Mtot)                   # K idx = (dy*4+dx)*Cin+ci
    if K_pad != K or M_pad != Mtot:
        patches = jnp.pad(patches, ((0, K_pad - K), (0, M_pad - Mtot)))

    # Weight OIHW -> (Cout, K) with the same K ordering; bias as an f32 column.
    w_mat = jnp.transpose(w_oihw, (0, 2, 3, 1)).reshape(Cout, K)
    w_mat = w_mat.astype(compute_dtype)
    if K_pad != K:
        w_mat = jnp.pad(w_mat, ((0, 0), (0, K_pad - K)))
    b_col = bias.reshape(Cout, 1).astype(jnp.float32)

    grid = (M_pad // TM, K_pad // TK)
    out_flat = pl.pallas_call(
        _down_kernel,
        out_shape=jax.ShapeDtypeStruct((Cout, M_pad), out_dtype),
        grid_spec=pltpu.PrefetchScalarGridSpec(
            num_scalar_prefetch=0,
            grid=grid,
            in_specs=[
                pl.BlockSpec((TK, TM), lambda m, k: (k, m)),
                pl.BlockSpec((Cout, TK), lambda m, k: (0, k)),
                pl.BlockSpec((Cout, 1), lambda m, k: (0, 0)),
            ],
            out_specs=pl.BlockSpec((Cout, TM), lambda m, k: (0, m)),
            scratch_shapes=[pltpu.VMEM((Cout, TM), jnp.float32)],
        ),
        compiler_params=pltpu.CompilerParams(
            dimension_semantics=("parallel", "arbitrary"),
            vmem_limit_bytes=int(vmem_limit)),
    )(patches, w_mat, b_col)

    # Drop lane padding, un-fold batch, restore NCHW.
    out = out_flat[:, :Mtot].reshape(Cout, N, H_out, W_out)
    return jnp.transpose(out, (1, 0, 2, 3))


def down_reference(x_nchw, w_oihw, bias):
    """Pure-JAX reference mirroring the PyTorch module."""
    y = lax.conv_general_dilated(
        x_nchw.astype(jnp.float32), w_oihw.astype(jnp.float32),
        window_strides=(2, 2), padding=((1, 1), (1, 1)),
        dimension_numbers=("NCHW", "OIHW", "NCHW"))
    return y + bias.reshape(1, -1, 1, 1)


if __name__ == "__main__":
    # Small shapes consistent with the module: Down(dim=4) on a 16x16 image.
    N, dim, H, W = 2, 4, 16, 16

    key = jax.random.PRNGKey(0)
    kx, kw, kb = jax.random.split(key, 3)

    x = jax.random.normal(kx, (N, dim, H, W), dtype=jnp.float32)
    fan_in = dim * 4 * 4
    w = jax.random.normal(kw, (dim, dim, 4, 4), dtype=jnp.float32) / jnp.sqrt(
        jnp.float32(fan_in))
    b = 0.1 * jax.random.normal(kb, (dim,), dtype=jnp.float32)

    ref_f32 = down_reference(x, w, b)

    # Exact path: f32 MXU operands, tight match against the f32 reference.
    out_f32 = jax.block_until_ready(down_forward(x, w, b, use_bf16=False))
    assert out_f32.shape == (N, dim, H // 2, W // 2)
    assert jnp.allclose(out_f32, ref_f32, atol=1e-4, rtol=1e-4), "f32 mismatch"

    # Default fast path: bf16 operands, f32 accumulation; compare against a
    # reference computed from the same bf16-rounded operands.
    out_bf = jax.block_until_ready(down_forward(x, w, b, use_bf16=True))
    ref_bf = down_reference(x.astype(jnp.bfloat16), w.astype(jnp.bfloat16), b)
    assert out_bf.shape == (N, dim, H // 2, W // 2)
    assert jnp.allclose(out_bf, ref_bf, atol=1e-2, rtol=1e-2), "bf16 mismatch"

    print("KERNEL_OK")
</pallas_src>

<mosaic_0001>
module attributes {stable_mosaic.version = 11 : i64} {
  func.func @_down_kernel(%arg0: i32, %arg1: i32, %arg2: memref<64x128xf32, #tpu.memory_space<vmem>>, %arg3: memref<4x64xf32, #tpu.memory_space<vmem>>, %arg4: memref<4x1xf32, #tpu.memory_space<vmem>>, %arg5: memref<4x128xf32, #tpu.memory_space<vmem>>, %arg6: memref<4x128xf32, #tpu.memory_space<vmem>>) attributes {dimension_semantics = [#tpu.dimension_semantics<parallel>, #tpu.dimension_semantics<arbitrary>], iteration_bounds = array<i64: 1, 1>, scalar_prefetch = 0 : i64, scratch_operands = 1 : i64, tpu.core_type = #tpu.core_type<tc>, window_params = [{transform_indices = @transform_0, window_bounds = array<i64: 64, 128>}, {transform_indices = @transform_1, window_bounds = array<i64: 4, 64>}, {pipeline_mode = #tpu.pipeline_mode<synchronous>, transform_indices = @transform_2, window_bounds = array<i64: 4, 1>}, {transform_indices = @transform_3, window_bounds = array<i64: 4, 128>}]} {
    %c0_i32 = arith.constant 0 : i32
    %0 = arith.cmpi eq, %arg1, %c0_i32 : i32
    %1 = arith.extui %0 : i1 to i32
    %c0_i32_0 = arith.constant 0 : i32
    %2 = arith.cmpi ne, %1, %c0_i32_0 : i32
    scf.if %2 {
      %cst_10 = arith.constant 0.000000e+00 : f32
      %12 = vector.broadcast %cst_10 : f32 to vector<4x128xf32>
      %c0_11 = arith.constant 0 : index
      %c0_12 = arith.constant 0 : index
      %13 = vector.load %arg6[%c0_11, %c0_12] : memref<4x128xf32, #tpu.memory_space<vmem>>, vector<4x128xf32>
      tpu.vector_store %arg6[%c0_11, %c0_12], %12 {strides = array<i32>} : memref<4x128xf32, #tpu.memory_space<vmem>>, vector<4x128xf32>,
    } else {
    }
    %c0 = arith.constant 0 : index
    %c0_1 = arith.constant 0 : index
    %3 = vector.load %arg6[%c0, %c0_1] : memref<4x128xf32, #tpu.memory_space<vmem>>, vector<4x128xf32>
    %c0_2 = arith.constant 0 : index
    %c0_3 = arith.constant 0 : index
    %4 = vector.load %arg3[%c0_2, %c0_3] : memref<4x64xf32, #tpu.memory_space<vmem>>, vector<4x64xf32>
    %c0_4 = arith.constant 0 : index
    %c0_5 = arith.constant 0 : index
    %5 = vector.load %arg2[%c0_4, %c0_5] : memref<64x128xf32, #tpu.memory_space<vmem>>, vector<64x128xf32>
    %cst = arith.constant dense<0.000000e+00> : vector<4x128xf32>
    %6 = tpu.matmul %4, %5, %cst {dimension_numbers = #tpu.dot_dimension_numbers<[1], [0], [0], [1], [0, 0, 1, 1], [], []>} : vector<4x64xf32>, vector<64x128xf32>, vector<4x128xf32> -> vector<4x128xf32>
    %7 = arith.addf %3, %6 : vector<4x128xf32>
    %c0_6 = arith.constant 0 : index
    %c0_7 = arith.constant 0 : index
    %8 = vector.load %arg6[%c0_6, %c0_7] : memref<4x128xf32, #tpu.memory_space<vmem>>, vector<4x128xf32>
    tpu.vector_store %arg6[%c0_6, %c0_7], %7 {strides = array<i32>} : memref<4x128xf32, #tpu.memory_space<vmem>>, vector<4x128xf32>,
    %c0_i32_8 = arith.constant 0 : i32
    %9 = arith.cmpi eq, %arg1, %c0_i32_8 : i32
    %10 = arith.extui %9 : i1 to i32
    %c0_i32_9 = arith.constant 0 : i32
    %11 = arith.cmpi ne, %10, %c0_i32_9 : i32
    scf.if %11 {
      %c0_10 = arith.constant 0 : index
      %c0_11 = arith.constant 0 : index
      %12 = vector.load %arg6[%c0_10, %c0_11] : memref<4x128xf32, #tpu.memory_space<vmem>>, vector<4x128xf32>
      %c0_12 = arith.constant 0 : index
      %c0_13 = arith.constant 0 : index
      %13 = vector.load %arg4[%c0_12, %c0_13] : memref<4x1xf32, #tpu.memory_space<vmem>>, vector<4x1xf32>
      %14 = vector.broadcast %13 : vector<4x1xf32> to vector<4x128xf32>
      %15 = arith.addf %12, %14 : vector<4x128xf32>
      %c0_14 = arith.constant 0 : index
      %c0_15 = arith.constant 0 : index
      %16 = vector.load %arg5[%c0_14, %c0_15] : memref<4x128xf32, #tpu.memory_space<vmem>>, vector<4x128xf32>
      tpu.vector_store %arg5[%c0_14, %c0_15], %15 {strides = array<i32>} : memref<4x128xf32, #tpu.memory_space<vmem>>, vector<4x128xf32>,
    } else {
    }
    return
  }
  func.func @transform_0(%arg0: i32, %arg1: i32) -> (i32, i32) {
    %c0_i32 = arith.constant 0 : i32
    return %arg1, %arg0 : i32, i32
  }
  func.func @transform_1(%arg0: i32, %arg1: i32) -> (i32, i32) {
    %c0_i32 = arith.constant 0 : i32
    %c0_i32_0 = arith.constant 0 : i32
    return %c0_i32, %arg1 : i32, i32
  }
  func.func @transform_2(%arg0: i32, %arg1: i32) -> (i32, i32) {
    %c0_i32 = arith.constant 0 : i32
    %c0_i32_0 = arith.constant 0 : i32
    %c0_i32_1 = arith.constant 0 : i32
    return %c0_i32, %c0_i32_0 : i32, i32
  }
  func.func @transform_3(%arg0: i32, %arg1: i32) -> (i32, i32) {
    %c0_i32 = arith.constant 0 : i32
    %c0_i32_0 = arith.constant 0 : i32
    return %c0_i32, %arg0 : i32, i32
  }
}

</mosaic_0001>

<llo_original>
// kernel: tpu_custom_call.1
$region0: #{tpu_custom_call.1}
  #allocation0 [shape = 'u32[]', space=smem, size = 0x4, offset = 0x4, fixed_abs, tag = 'smem constant byte address 0x4 - core index']
  #allocation1 [shape = 'u32[144,128]{1,0:T(1,128)}', space=vmem, size = 0x12000, scoped, tag = 'internal scratch']
  #allocation2 [shape = 'f32[4,128]{1,0:T(4,128)}', space=vmem, size = 0x800, scoped, tag = 'scratch operand']
  %s0 = inlined_call_operand.hbm [shape: f32[64,128], index: 0, kind: input, shape index: {}]
  %s1 = inlined_call_operand.vmem [shape: f32[4,64], index: 1, kind: input, shape index: {}]
  %s2 = inlined_call_operand.vmem [shape: f32[4,1], index: 2, kind: input, shape index: {}]
  %s3 = inlined_call_operand.hbm [shape: f32[4,128], index: 3, kind: output, shape index: {}]
  %s4 = sld [smem:[#allocation0]]
  $region34: #{tpu_custom_call.1} parent=0
    _
  %s6 = ssub.s32 1, %s4
  %s7 = scalar_select 0, %s6, %s4
  $region1: #{tpu_custom_call.1} parent=0
    #allocation3 [shape = 'u8[32768]{0}', space=vmem, size = 0x8000, scoped, tag = 'input window, operand 0, single buffered']
    #allocation4 [shape = 's32[1]{0}', space=sflag, size = 0x4, scoped, tag = 'scoped memory for tpu_custom_call.1']
    #allocation5 [shape = 's32[1]{0}', space=sflag, size = 0x4, scoped, tag = 'scoped memory for tpu_custom_call.1']
    #allocation6 [shape = 'u8[2048]{0}', space=vmem, size = 0x800, scoped, tag = 'output window, operand 0, single buffered']
    %8 = vsyncpa [#allocation4], 0
    %9 = vsyncpa [#allocation5], 0
    // Predicated region
    $region2: #{tpu_custom_call.1} parent=1 // pred_check
      _
    $region3: #{tpu_custom_call.1} parent=1 // pred_check_branch
      %11 = sbr.rel (0) target = $region5
    $region4: #{tpu_custom_call.1} parent=1 // pred_region
      %s13 = ssub.s32 1024, 1024
      %14 = vsyncadd [#allocation4], %s13
      %s15 = sshll.u32 [#allocation3], 4
      %s16 = int_to_ptr.vmem [resolvable:$true] %s15
      %21 = dma.hbm_to_vmem [thread:$0]  %s0, 1024, %s16, [#allocation4], 128, 128, 8
    $region5: #{tpu_custom_call.1} parent=1 // pred_fallthru
      _
    // Predicated region
    $region6: #{tpu_custom_call.1} parent=1 // pred_check
      _
    $region7: #{tpu_custom_call.1} parent=1 // pred_check_branch
      %23 = sbr.rel (0) target = $region9
    $region8: #{tpu_custom_call.1} parent=1 // pred_region
      _
    $region9: #{tpu_custom_call.1} parent=1 // pred_fallthru
      _
    // Predicated region
    $region10: #{tpu_custom_call.1} parent=1 // pred_check
      _
    $region11: #{tpu_custom_call.1} parent=1 // pred_check_branch
      %25 = sbr.rel (0) target = $region13
    $region12: #{tpu_custom_call.1} parent=1 // pred_region
      _
    $region13: #{tpu_custom_call.1} parent=1 // pred_fallthru
      _
    // Predicated region
    $region14: #{tpu_custom_call.1} parent=1 // pred_check
      _
    $region15: #{tpu_custom_call.1} parent=1 // pred_check_branch
      %27 = sbr.rel (0) target = $region17
    $region16: #{tpu_custom_call.1} parent=1 // pred_region
      %28 = dma.done [#allocation4], 1024
    $region17: #{tpu_custom_call.1} parent=1 // pred_fallthru
      _
    %p29 = scmp.eq.s32.totalorder 0, 0
    // Predicated region
    $region18: #{tpu_custom_call.1} parent=1 // pred_check
      %p30 = pneg %p29
    $region19: #{tpu_custom_call.1} parent=1 // pred_check_branch
      %32 = sbr.rel (%p30) target = $region21
    $region20: #{tpu_custom_call.1} parent=1 // pred_region
      %33 = vst [vmem:[#allocation2] sm:$0xf] 0.0
    $region21: #{tpu_custom_call.1} parent=1 // pred_fallthru
      _
    %v34 = vld [vmem:[#allocation2] sm:$0xf]
    %v35 = vld [vmem:[%s1] sm:$0xf]
    %v36 = vld [vmem:[#allocation3] sm:$0xff]
    %v37 = vld [vmem:[#allocation3 + $0x8] sm:$0xff]
    %v38 = vld [vmem:[#allocation3 + $0x10] sm:$0xff]
    %v39 = vld [vmem:[#allocation3 + $0x18] sm:$0xff]
    %v40 = vld [vmem:[#allocation3 + $0x20] sm:$0xff]
    %v41 = vld [vmem:[#allocation3 + $0x28] sm:$0xff]
    %v42 = vld [vmem:[#allocation3 + $0x30] sm:$0xff]
    %v43 = vld [vmem:[#allocation3 + $0x38] sm:$0xff]
    %vm44 = vcmask 523264
    %v46 = vsel %vm44, %v35, 0
    %48 = vmatprep.subr.mxu0 0.0
    %49 = vmatpush1.msra.mxu0 0.0
    %50 = vmatprep.subr.mxu0 0.0
    %51 = vmatpush1.msra.mxu0 0.0
    %52 = vmatprep.subr.mxu0 0.0
    %53 = vmatpush1.msra.mxu0 0.0
    %54 = vmatprep.subr.mxu0 0.0
    %55 = vmatpush1.msra.mxu0 0.0
    %56 = vmatprep.subr.mxu0 0.0
    %57 = vmatpush1.msra.mxu0 0.0
    %58 = vmatprep.subr.mxu0 0.0
    %59 = vmatpush1.msra.mxu0 0.0
    %60 = vmatprep.subr.mxu0 0.0
    %61 = vmatpush1.msra.mxu0 0.0
    %62 = vmatprep.subr.mxu0 0.0
    %63 = vmatpush1.msra.mxu0 0.0
    %64 = vmatprep.subr.mxu0 0.0
    %65 = vmatpush1.msra.mxu0 %v43
    %66 = vmatprep.subr.mxu0 0.0
    %67 = vmatpush1.msra.mxu0 %v42
    %68 = vmatprep.subr.mxu0 0.0
    %69 = vmatpush1.msra.mxu0 %v41
    %70 = vmatprep.subr.mxu0 0.0
    %71 = vmatpush1.msra.mxu0 %v40
    %72 = vmatprep.subr.mxu0 0.0
    %73 = vmatpush1.msra.mxu0 %v39
    %74 = vmatprep.subr.mxu0 0.0
    %75 = vmatpush1.msra.mxu0 %v38
    %76 = vmatprep.subr.mxu0 0.0
    %77 = vmatpush1.msra.mxu0 %v37
    %78 = vmatprep.subr.mxu0 0.0
    %79 = vmatpush1.msra.mxu0 %v36
    %80 = vmatprep.subr.mxu0 0.0
    %81 = vmatpush2.msra.mxu0 0.0
    %82 = vmatprep.subr.mxu0 0.0
    %83 = vmatpush2.msra.mxu0 0.0
    %84 = vmatprep.subr.mxu0 0.0
    %85 = vmatpush2.msra.mxu0 0.0
    %86 = vmatprep.subr.mxu0 0.0
    %87 = vmatpush2.msra.mxu0 0.0
    %88 = vmatprep.subr.mxu0 0.0
    %89 = vmatpush2.msra.mxu0 0.0
    %90 = vmatprep.subr.mxu0 0.0
    %91 = vmatpush2.msra.mxu0 0.0
    %92 = vmatprep.subr.mxu0 0.0
    %93 = vmatpush2.msra.mxu0 0.0
    %94 = vmatprep.subr.mxu0 0.0
    %95 = vmatpush2.msra.mxu0 0.0
    %96 = vmatprep.subr.mxu0 0.0
    %97 = vmatpush2.msra.mxu0 0.0
    %98 = vmatprep.subr.mxu0 0.0
    %99 = vmatpush2.msra.mxu0 0.0
    %100 = vmatprep.subr.mxu0 0.0
    %101 = vmatpush2.msra.mxu0 0.0
    %102 = vmatprep.subr.mxu0 0.0
    %103 = vmatpush2.msra.mxu0 0.0
    %104 = vmatprep.subr.mxu0 0.0
    %105 = vmatpush2.msra.mxu0 0.0
    %106 = vmatprep.subr.mxu0 0.0
    %107 = vmatpush2.msra.mxu0 0.0
    %108 = vmatprep.subr.mxu0 0.0
    %109 = vmatpush2.msra.mxu0 0.0
    %110 = vmatprep.subr.mxu0 0.0
    %111 = vmatpush2.msra.mxu0 0.0
    %112 = vmatprep.mubr.f32.mxu0 0.0
    %113 = vmatmul.mubr.f32.gmra.mxu0 %v46
    %v114 = vpop.f32.mrf.mxu0
    %v115 = vadd.f32 0.0, %v114
    %v116 = vpop.f32.mrf.mxu0
    %117 = vdwg.mxu0
    %v118 = vadd.f32 %v34, %v115
    %119 = vst [vmem:[#allocation2] sm:$0xf] %v118
    // Predicated region
    $region22: #{tpu_custom_call.1} parent=1 // pred_check
      %p120 = pneg %p29
    $region23: #{tpu_custom_call.1} parent=1 // pred_check_branch
      %122 = sbr.rel (%p120) target = $region25
    $region24: #{tpu_custom_call.1} parent=1 // pred_region
      %v123 = vld [vmem:[#allocation2] sm:$0xf]
      %v124 = vld [vmem:[%s2] sm:$0xf]
      %126 = vset.pattern.permute.xlu0 0
      %127 = vperm.xlu0 %126, %v124
      %v128 = vpop.permute.xlu0 %127
      %v130 = vadd.f32 %v123, %v128
      %131 = vst [vmem:[#allocation6] sm:$0xf] %v130
    $region25: #{tpu_custom_call.1} parent=1 // pred_fallthru
      _
    // Predicated region
    $region26: #{tpu_custom_call.1} parent=1 // pred_check
      _
    $region27: #{tpu_custom_call.1} parent=1 // pred_check_branch
      %133 = sbr.rel (0) target = $region29
    $region28: #{tpu_custom_call.1} parent=1 // pred_region
      %s135 = ssub.s32 64, 64
      %136 = vsyncadd [#allocation5], %s135
      %s138 = sshll.u32 [#allocation6], 4
      %s139 = int_to_ptr.vmem [resolvable:$true] %s138
      %141 = dma.vmem_to_hbm [thread:$0]  %s139, 64, %s3, [#allocation5]
    $region29: #{tpu_custom_call.1} parent=1 // pred_fallthru
      _
    // Predicated region
    $region30: #{tpu_custom_call.1} parent=1 // pred_check
      _
    $region31: #{tpu_custom_call.1} parent=1 // pred_check_branch
      %143 = sbr.rel (0) target = $region33
    $region32: #{tpu_custom_call.1} parent=1 // pred_region
      %144 = dma.done [#allocation5], 64
    $region33: #{tpu_custom_call.1} parent=1 // pred_fallthru
      _
    %145 = vsyncpa [#allocation4], 1
    %146 = vsyncpa [#allocation5], 1

</llo_original>
